<compile_context>
chip_gen: v7x
topology: tpu7x:2x2x1
jax: 0.10.0
libtpu: 0.0.40
codegen_flags: <defaults>
</compile_context>

<pallas_src>
import functools
import math

import jax
import jax.numpy as jnp
import numpy as np
from jax.experimental import pallas as pl
from jax.experimental.pallas import tpu as pltpu


# ----------------------------- Pallas kernel ------------------------------- #

def _conv_kernel(x_ref, w_ref, o_ref, pt_ref, *, K, dilation, Wp, C_in, ncols):
    # x_ref : (C_in, ncols)       lane-flattened, zero-padded image(s), ncols%128==0
    # w_ref : (C_out, K*K*C_in)   weight, contraction ordered (kh, kw, ci)
    # o_ref : (C_out, ncols)      lane-dense output block
    # pt_ref: (K*K*C_in, ncols)   VMEM scratch: rolled-tap stack (im2col matrix)
    x = x_ref[...]
    for kh in range(K):
        for kw in range(K):
            t = kh * K + kw
            off = (kh * Wp + kw) * dilation
            # Left-roll by `off` (jnp.roll semantics): rolled[:, p] = x[:, p+off].
            # Wrap-around only touches columns outside the valid output window.
            rolled = x if off == 0 else pltpu.roll(x, shift=(-off) % ncols, axis=1)
            pt_ref[t * C_in:(t + 1) * C_in, :] = rolled.astype(pt_ref.dtype)

    # Single fused MXU matmul: (C_out, K*K*C_in) @ (K*K*C_in, ncols).
    acc = jnp.dot(w_ref[...], pt_ref[...], preferred_element_type=jnp.float32)
    o_ref[...] = acc.astype(o_ref.dtype)


# ------------------------------ JAX wrapper -------------------------------- #

def factorized_conv_forward(x_nchw, uu, vv, mask, *, d_i, d_o, d_k,
                            stride=1, padding=0, dilation=1):
    """Forward pass of FactorizedConv (groups=1, bias=False, has_mask=True)."""
    # TODO(synk): groups != 1, bias, and string-valued padding are not implemented
    # (module defaults: groups=1, bias=False, integer padding). prune() is the
    # identity in training mode (and l1=0), so it is a no-op here.
    assert not isinstance(padding, str)

    # Weight formation: tiny (~1 KiB), single XLA fusion inside the jitted call.
    w_flat = uu @ vv + mask                               # (K*K, d_o*d_i)
    weight = w_flat.reshape(d_o, d_i, d_k, d_k)           # torch .view -> OIHW
    # Reorder contraction to (kh, kw, ci) to match the rolled-tap row layout.
    w2d = jnp.transpose(weight, (0, 2, 3, 1)).reshape(d_o, d_k * d_k * d_i)
    # TODO(synk): optionally cast x / w2d to bfloat16 (MXU-native on all gens);
    # kept f32 here to preserve 1e-4 parity with the f32 conv reference.

    B, C_in, H, W = x_nchw.shape
    assert C_in == d_i
    ph = pw = int(padding)
    Hp, Wp = H + 2 * ph, W + 2 * pw
    eff_k = dilation * (d_k - 1) + 1
    OH = (Hp - eff_k) // stride + 1
    OW = (Wp - eff_k) // stride + 1

    # Lane-padded per-image column count (multiple of 128 -> unmasked vld/vst).
    Np = ((Hp * Wp + 127) // 128) * 128

    # One-time HBM pad + lane-flatten.  Rolls never contaminate valid columns:
    # for any valid output position p, p + off_max <= Hp*Wp - 1 < Np.
    xp = jnp.pad(x_nchw, ((0, 0), (0, 0), (ph, ph), (pw, pw)))
    xf = xp.reshape(B, C_in, Hp * Wp)
    if Np > Hp * Wp:
        xf = jnp.pad(xf, ((0, 0), (0, 0), (0, Np - Hp * Wp)))
    xf = jnp.transpose(xf, (1, 0, 2)).reshape(C_in, B * Np)   # (C_in, B*Np)

    # Fold the batch into the lane axis; split it into at most two "parallel"
    # column blocks so both v7x TensorCores get work (one block per core when
    # B is even); v5e/v6e just run the (few) blocks sequentially.
    n_steps = 2 if (B >= 2 and B % 2 == 0) else B
    bps = B // n_steps                  # batches per grid step
    ncols = bps * Np                    # lane width per step (multiple of 128)

    kern = functools.partial(
        _conv_kernel, K=d_k, dilation=dilation, Wp=Wp, C_in=d_i, ncols=ncols,
    )

    # TODO(synk): for large images (v7x: 64 MiB VMEM, 32 MiB scoped default) add
    # a grid axis over OH row stripes with an (eff_k-1)-row halo on the input
    # block and set vmem_limit_bytes; whole-image blocks are tiny at these sizes.
    out = pl.pallas_call(
        kern,
        out_shape=jax.ShapeDtypeStruct((d_o, B * Np), x_nchw.dtype),
        grid=(n_steps,),
        in_specs=[
            pl.BlockSpec((d_i, ncols), lambda i: (0, i)),
            pl.BlockSpec((d_o, d_k * d_k * d_i), lambda i: (0, 0)),
        ],
        out_specs=pl.BlockSpec((d_o, ncols), lambda i: (0, i)),
        scratch_shapes=[pltpu.VMEM((d_k * d_k * d_i, ncols), jnp.float32)],
        compiler_params=pltpu.CompilerParams(dimension_semantics=("parallel",)),
    )(xf, w2d)

    # Cheap XLA views/slices back to NCHW; stride handled here by a strided
    # slice of the dense stride-1 result (avoids strided pl.ds in the kernel).
    out = out.reshape(d_o, B, Np)[:, :, :Hp * Wp].reshape(d_o, B, Hp, Wp)
    out = out[:, :, :(OH - 1) * stride + 1:stride, :(OW - 1) * stride + 1:stride]
    return jnp.transpose(out, (1, 0, 2, 3))


# ------------------------------ init helpers ------------------------------- #

def xavier_uniform(key, shape):
    # torch.nn.init.xavier_uniform_ for a 2-D tensor: fan_out=rows, fan_in=cols
    fan_out, fan_in = shape
    bound = math.sqrt(6.0 / (fan_in + fan_out))
    return jax.random.uniform(key, shape, jnp.float32, -bound, bound)


# ---------------------------------- main ----------------------------------- #

if __name__ == "__main__":
    # module config (defaults except: small non-trivial test sizes)
    d_i, d_o, d_k, rank = 4, 8, 3, 2
    stride, padding, dilation = 1, 1, 1
    B, H, W = 2, 16, 16

    key = jax.random.PRNGKey(0)
    k_uu, k_vv, k_x = jax.random.split(key, 3)
    uu = xavier_uniform(k_uu, (d_k * d_k, rank))
    vv = xavier_uniform(k_vv, (rank, d_o * d_i))
    mask = jnp.zeros((d_k * d_k, d_o * d_i), jnp.float32)  # __init__ value (zeros)
    x = jax.random.normal(k_x, (B, d_i, H, W), jnp.float32)

    fwd = jax.jit(functools.partial(
        factorized_conv_forward, d_i=d_i, d_o=d_o, d_k=d_k,
        stride=stride, padding=padding, dilation=dilation))
    out = jax.block_until_ready(fwd(x, uu, vv, mask))

    # pure-JAX reference (mirrors the PyTorch forward)
    w_flat_ref = uu @ vv + mask
    weight_ref = w_flat_ref.reshape(d_o, d_i, d_k, d_k)
    ref = jax.lax.conv_general_dilated(
        x, weight_ref,
        window_strides=(stride, stride),
        padding=[(padding, padding), (padding, padding)],
        rhs_dilation=(dilation, dilation),
        dimension_numbers=("NCHW", "OIHW", "NCHW"),
    )

    assert out.shape == ref.shape, (out.shape, ref.shape)
    assert np.allclose(np.asarray(out), np.asarray(ref), atol=1e-4, rtol=1e-4)
    print("KERNEL_OK")
</pallas_src>

<mosaic_0001>
module attributes {stable_mosaic.version = 11 : i64} {
  func.func @_conv_kernel(%arg0: i32, %arg1: memref<4x384xf32, #tpu.memory_space<vmem>>, %arg2: memref<8x36xf32, #tpu.memory_space<vmem>>, %arg3: memref<8x384xf32, #tpu.memory_space<vmem>>, %arg4: memref<36x384xf32, #tpu.memory_space<vmem>>) attributes {dimension_semantics = [#tpu.dimension_semantics<parallel>], iteration_bounds = array<i64: 2>, scalar_prefetch = 0 : i64, scratch_operands = 1 : i64, tpu.core_type = #tpu.core_type<tc>, window_params = [{transform_indices = @transform_0, window_bounds = array<i64: 4, 384>}, {pipeline_mode = #tpu.pipeline_mode<synchronous>, transform_indices = @transform_1, window_bounds = array<i64: 8, 36>}, {transform_indices = @transform_2, window_bounds = array<i64: 8, 384>}]} {
    %c0 = arith.constant 0 : index
    %c0_0 = arith.constant 0 : index
    %0 = vector.load %arg1[%c0, %c0_0] : memref<4x384xf32, #tpu.memory_space<vmem>>, vector<4x384xf32>
    %c0_1 = arith.constant 0 : index
    %c0_2 = arith.constant 0 : index
    %1 = vector.load %arg4[%c0_1, %c0_2] : memref<36x384xf32, #tpu.memory_space<vmem>>, vector<4x384xf32>
    tpu.vector_store %arg4[%c0_1, %c0_2], %0 {strides = array<i32>} : memref<36x384xf32, #tpu.memory_space<vmem>>, vector<4x384xf32>,
    %c383_i32 = arith.constant 383 : i32
    %2 = tpu.dynamic_rotate %0 by %c383_i32 dim 1 : vector<4x384xf32>, i32 -> vector<4x384xf32>
    %c4 = arith.constant 4 : index
    %c0_3 = arith.constant 0 : index
    %3 = vector.load %arg4[%c4, %c0_3] : memref<36x384xf32, #tpu.memory_space<vmem>>, vector<4x384xf32>
    tpu.vector_store %arg4[%c4, %c0_3], %2 {strides = array<i32>} : memref<36x384xf32, #tpu.memory_space<vmem>>, vector<4x384xf32>,
    %c382_i32 = arith.constant 382 : i32
    %4 = tpu.dynamic_rotate %0 by %c382_i32 dim 1 : vector<4x384xf32>, i32 -> vector<4x384xf32>
    %c8 = arith.constant 8 : index
    %c0_4 = arith.constant 0 : index
    %5 = vector.load %arg4[%c8, %c0_4] : memref<36x384xf32, #tpu.memory_space<vmem>>, vector<4x384xf32>
    tpu.vector_store %arg4[%c8, %c0_4], %4 {strides = array<i32>} : memref<36x384xf32, #tpu.memory_space<vmem>>, vector<4x384xf32>,
    %c366_i32 = arith.constant 366 : i32
    %6 = tpu.dynamic_rotate %0 by %c366_i32 dim 1 : vector<4x384xf32>, i32 -> vector<4x384xf32>
    %c12 = arith.constant 12 : index
    %c0_5 = arith.constant 0 : index
    %7 = vector.load %arg4[%c12, %c0_5] : memref<36x384xf32, #tpu.memory_space<vmem>>, vector<4x384xf32>
    tpu.vector_store %arg4[%c12, %c0_5], %6 {strides = array<i32>} : memref<36x384xf32, #tpu.memory_space<vmem>>, vector<4x384xf32>,
    %c365_i32 = arith.constant 365 : i32
    %8 = tpu.dynamic_rotate %0 by %c365_i32 dim 1 : vector<4x384xf32>, i32 -> vector<4x384xf32>
    %c16 = arith.constant 16 : index
    %c0_6 = arith.constant 0 : index
    %9 = vector.load %arg4[%c16, %c0_6] : memref<36x384xf32, #tpu.memory_space<vmem>>, vector<4x384xf32>
    tpu.vector_store %arg4[%c16, %c0_6], %8 {strides = array<i32>} : memref<36x384xf32, #tpu.memory_space<vmem>>, vector<4x384xf32>,
    %c364_i32 = arith.constant 364 : i32
    %10 = tpu.dynamic_rotate %0 by %c364_i32 dim 1 : vector<4x384xf32>, i32 -> vector<4x384xf32>
    %c20 = arith.constant 20 : index
    %c0_7 = arith.constant 0 : index
    %11 = vector.load %arg4[%c20, %c0_7] : memref<36x384xf32, #tpu.memory_space<vmem>>, vector<4x384xf32>
    tpu.vector_store %arg4[%c20, %c0_7], %10 {strides = array<i32>} : memref<36x384xf32, #tpu.memory_space<vmem>>, vector<4x384xf32>,
    %c348_i32 = arith.constant 348 : i32
    %12 = tpu.dynamic_rotate %0 by %c348_i32 dim 1 : vector<4x384xf32>, i32 -> vector<4x384xf32>
    %c24 = arith.constant 24 : index
    %c0_8 = arith.constant 0 : index
    %13 = vector.load %arg4[%c24, %c0_8] : memref<36x384xf32, #tpu.memory_space<vmem>>, vector<4x384xf32>
    tpu.vector_store %arg4[%c24, %c0_8], %12 {strides = array<i32>} : memref<36x384xf32, #tpu.memory_space<vmem>>, vector<4x384xf32>,
    %c347_i32 = arith.constant 347 : i32
    %14 = tpu.dynamic_rotate %0 by %c347_i32 dim 1 : vector<4x384xf32>, i32 -> vector<4x384xf32>
    %c28 = arith.constant 28 : index
    %c0_9 = arith.constant 0 : index
    %15 = vector.load %arg4[%c28, %c0_9] : memref<36x384xf32, #tpu.memory_space<vmem>>, vector<4x384xf32>
    tpu.vector_store %arg4[%c28, %c0_9], %14 {strides = array<i32>} : memref<36x384xf32, #tpu.memory_space<vmem>>, vector<4x384xf32>,
    %c346_i32 = arith.constant 346 : i32
    %16 = tpu.dynamic_rotate %0 by %c346_i32 dim 1 : vector<4x384xf32>, i32 -> vector<4x384xf32>
    %c32 = arith.constant 32 : index
    %c0_10 = arith.constant 0 : index
    %17 = vector.load %arg4[%c32, %c0_10] : memref<36x384xf32, #tpu.memory_space<vmem>>, vector<4x384xf32>
    tpu.vector_store %arg4[%c32, %c0_10], %16 {strides = array<i32>} : memref<36x384xf32, #tpu.memory_space<vmem>>, vector<4x384xf32>,
    %c0_11 = arith.constant 0 : index
    %c0_12 = arith.constant 0 : index
    %18 = vector.load %arg2[%c0_11, %c0_12] : memref<8x36xf32, #tpu.memory_space<vmem>>, vector<8x36xf32>
    %c0_13 = arith.constant 0 : index
    %c0_14 = arith.constant 0 : index
    %19 = vector.load %arg4[%c0_13, %c0_14] : memref<36x384xf32, #tpu.memory_space<vmem>>, vector<36x384xf32>
    %cst = arith.constant dense<0.000000e+00> : vector<8x384xf32>
    %20 = tpu.matmul %18, %19, %cst {dimension_numbers = #tpu.dot_dimension_numbers<[1], [0], [0], [1], [0, 0, 1, 1], [], []>} : vector<8x36xf32>, vector<36x384xf32>, vector<8x384xf32> -> vector<8x384xf32>
    %c0_15 = arith.constant 0 : index
    %c0_16 = arith.constant 0 : index
    %21 = vector.load %arg3[%c0_15, %c0_16] : memref<8x384xf32, #tpu.memory_space<vmem>>, vector<8x384xf32>
    tpu.vector_store %arg3[%c0_15, %c0_16], %20 {strides = array<i32>} : memref<8x384xf32, #tpu.memory_space<vmem>>, vector<8x384xf32>,
    return
  }
  func.func @transform_0(%arg0: i32) -> (i32, i32) {
    %c0_i32 = arith.constant 0 : i32
    %c0_i32_0 = arith.constant 0 : i32
    return %c0_i32, %arg0 : i32, i32
  }
  func.func @transform_1(%arg0: i32) -> (i32, i32) {
    %c0_i32 = arith.constant 0 : i32
    %c0_i32_0 = arith.constant 0 : i32
    %c0_i32_1 = arith.constant 0 : i32
    return %c0_i32, %c0_i32_0 : i32, i32
  }
  func.func @transform_2(%arg0: i32) -> (i32, i32) {
    %c0_i32 = arith.constant 0 : i32
    %c0_i32_0 = arith.constant 0 : i32
    return %c0_i32, %arg0 : i32, i32
  }
}

</mosaic_0001>

<llo_original>
// kernel: factorized_conv_forward.1
$region0: #{factorized_conv_forward.1}
  #allocation0 [shape = 'u32[]', space=smem, size = 0x4, offset = 0x4, fixed_abs, tag = 'smem constant byte address 0x4 - core index']
  #allocation1 [shape = 'u32[144,128]{1,0:T(1,128)}', space=vmem, size = 0x12000, scoped, tag = 'internal scratch']
  #allocation2 [shape = 'f32[36,384]{1,0:T(8,128)}', space=vmem, size = 0xf000, scoped, tag = 'scratch operand']
  %s0 = inlined_call_operand.vmem [shape: f32[4,768], index: 0, kind: input, shape index: {}]
  %s1 = inlined_call_operand.vmem [shape: f32[8,36], index: 1, kind: input, shape index: {}]
  %s2 = inlined_call_operand.vmem [shape: f32[8,768], index: 2, kind: output, shape index: {}]
  %s3 = sld [smem:[#allocation0]]
  $region41: #{factorized_conv_forward.1} parent=0
    _
  %s5 = ssub.s32 1, %s3
  %s6 = scalar_select 0, %s5, %s3
  loop: start=0, step=1, limit=4
  $region2: #{factorized_conv_forward.1} parent=0 // loop_pre_header
    _
  $region3: #{factorized_conv_forward.1} parent=0 // loop_header
    %s8 = sphi 0, %s12
    %p9 = scmp.ge.s32.totalorder %s8, 4
    %s18 = sphi 0, %s20
    %s21 = sphi 0, %s18
    %s22 = sphi 0, %s21
    %s38 = sphi 0, %s22
    %s42 = sphi 0, %s42
    %s44 = sphi 0, %s42
    %s45 = sphi 0, %s44
    %s59 = sphi 0, %s45
    %s65 = sphi 0, %s67
    %s68 = sphi 0, %s65
    %s69 = sphi 0, %s68
    %s85 = sphi 0, %s69
  $region4: #{factorized_conv_forward.1} parent=0 // loop_header_branch
    %11 = sbr.rel (%p9) target = $region8
  $region5: #{factorized_conv_forward.1} parent=0 // loop_body
    %s13 = ssub.s32 %s8, 1
    %s14 = ssub.s32 %s8, 2
    %s15 = sadd.s32 %s8, 1
    %s16 = ssub.s32 %s8, %s15
    %p17 = scmp.eq.s32.totalorder %s16, 0
    %s19 = sadd.s32 %s18, 1
    %s20 = scalar_select %p17, %s18, %s19
    %p23 = pneg %p17
    %p24 = scmp.eq.s32.totalorder %s8, 1
    %p25 = por %p23, %p24
    %p26 = scmp.ne.s32.totalorder %s18, %s21
    %p27 = scmp.eq.s32.totalorder %s8, 0
    %p28 = por %p26, %p27
    %p29 = scmp.ne.s32.totalorder %s18, %s21
    %p30 = scmp.eq.s32.totalorder %s13, 1
    %p31 = por %p29, %p30
    %p32 = scmp.ne.s32.totalorder %s21, %s22
    %p33 = scmp.eq.s32.totalorder %s13, 0
    %p34 = por %p32, %p33
    %p35 = scmp.ne.s32.totalorder %s21, %s22
    %p36 = scmp.eq.s32.totalorder %s14, 1
    %p37 = por %p35, %p36
    %p39 = scmp.ne.s32.totalorder %s22, %s38
    %p40 = scmp.eq.s32.totalorder %s14, 0
    %p41 = por %p39, %p40
    %s43 = sadd.s32 %s42, 1
    %p46 = scmp.eq.s32.totalorder %s8, 1
    %p47 = scmp.ne.s32.totalorder %s42, %s44
    %p48 = scmp.eq.s32.totalorder %s8, 0
    %p49 = por %p47, %p48
    %p50 = scmp.ne.s32.totalorder %s42, %s44
    %p51 = scmp.eq.s32.totalorder %s13, 1
    %p52 = por %p50, %p51
    %p53 = scmp.ne.s32.totalorder %s44, %s45
    %p54 = scmp.eq.s32.totalorder %s13, 0
    %p55 = por %p53, %p54
    %p56 = scmp.ne.s32.totalorder %s44, %s45
    %p57 = scmp.eq.s32.totalorder %s14, 1
    %p58 = por %p56, %p57
    %p60 = scmp.ne.s32.totalorder %s45, %s59
    %p61 = scmp.eq.s32.totalorder %s14, 0
    %p62 = por %p60, %p61
    %s63 = ssub.s32 %s8, %s15
    %p64 = scmp.eq.s32.totalorder %s63, 0
    %s66 = sadd.s32 %s65, 1
    %s67 = scalar_select %p64, %s65, %s66
    %p70 = pneg %p64
    %p71 = scmp.eq.s32.totalorder %s8, 1
    %p72 = por %p70, %p71
    %p73 = scmp.ne.s32.totalorder %s65, %s68
    %p74 = scmp.eq.s32.totalorder %s8, 0
    %p75 = por %p73, %p74
    %p76 = scmp.ne.s32.totalorder %s65, %s68
    %p77 = scmp.eq.s32.totalorder %s13, 1
    %p78 = por %p76, %p77
    %p79 = scmp.ne.s32.totalorder %s68, %s69
    %p80 = scmp.eq.s32.totalorder %s13, 0
    %p81 = por %p79, %p80
    %p82 = scmp.ne.s32.totalorder %s68, %s69
    %p83 = scmp.eq.s32.totalorder %s14, 1
    %p84 = por %p82, %p83
    %p86 = scmp.ne.s32.totalorder %s69, %s85
    %p87 = scmp.eq.s32.totalorder %s14, 0
    %p88 = por %p86, %p87
    %p89 = scmp.le.s32.totalorder 1, %s8
    %p90 = scmp.lt.s32.totalorder %s8, 3
    %p91 = pnand %p89, %p90
    %p92 = pneg %p91
    // Predicated region
    $region9: #{factorized_conv_forward.1} parent=5 // pred_check
      _
    $region10: #{factorized_conv_forward.1} parent=5 // pred_check_branch
      %94 = sbr.rel (%p91) target = $region12
    $region11: #{factorized_conv_forward.1} parent=5 // pred_region
      %s95 = ssub.s32 %s8, 1
      // Predicated region
      $region13: #{factorized_conv_forward.1} parent=11 // pred_check
        %p96 = pneg %p55
      $region14: #{factorized_conv_forward.1} parent=11 // pred_check_branch
        %98 = sbr.rel (%p96) target = $region16
      $region15: #{factorized_conv_forward.1} parent=11 // pred_region
        _
      $region16: #{factorized_conv_forward.1} parent=11 // pred_fallthru
        _
    $region12: #{factorized_conv_forward.1} parent=5 // pred_fallthru
      _
    %p99 = scmp.lt.s32.totalorder %s8, 2
    // Predicated region
    $region17: #{factorized_conv_forward.1} parent=5 // pred_check
      %p100 = pneg %p99
    $region18: #{factorized_conv_forward.1} parent=5 // pred_check_branch
      %102 = sbr.rel (%p100) target = $region20
    $region19: #{factorized_conv_forward.1} parent=5 // pred_region
      // Predicated region
      $region21: #{factorized_conv_forward.1} parent=19 // pred_check
        %p103 = pneg %p28
      $region22: #{factorized_conv_forward.1} parent=19 // pred_check_branch
        %105 = sbr.rel (%p103) target = $region24
      $region23: #{factorized_conv_forward.1} parent=19 // pred_region
        %s106 = smul.u32 3, %s8
        %p107 = scmp.lt.s32.totalorder %s106, 5
        %s108 = scalar_select %p107, %s106, 5
        %s109 = smul.addr %s108, 4
        %s110 = scalar_lea.vmem %s0, %s109
        %s111 = smul.u32 3, %s8
      $region24: #{factorized_conv_forward.1} parent=19 // pred_fallthru
        _
    $region20: #{factorized_conv_forward.1} parent=5 // pred_fallthru
      _
    %p112 = scmp.le.s32.totalorder 1, %s8
    %p113 = scmp.lt.s32.totalorder %s8, 3
    %p114 = pnand %p112, %p113
    %p115 = pneg %p114
    // Predicated region
    $region25: #{factorized_conv_forward.1} parent=5 // pred_check
      _
    $region26: #{factorized_conv_forward.1} parent=5 // pred_check_branch
      %117 = sbr.rel (%p114) target = $region28
    $region27: #{factorized_conv_forward.1} parent=5 // pred_region
      %s118 = ssub.s32 %s8, 1
      %s119 = smul.u32 3, %s13
      %p120 = scmp.lt.s32.totalorder %s119, 5
      %s121 = scalar_select %p120, %s119, 5
      %s122 = smul.addr %s121, 4
      %s123 = scalar_lea.vmem %s0, %s122
      %p124 = pneg %p34
      %p125 = pneg %p31
      %p126 = pneg %p55
      %p127 = pneg %p52
      %p128 = pneg %p81
      %p129 = pneg %p78
      %s130 = smul.u32 3, %s13
      %p131 = scmp.lt.s32.totalorder %s130, 5
      %s132 = scalar_select %p131, %s130, 5
      %s133 = smul.addr %s132, 8
      %s134 = scalar_lea.vmem %s2, %s133
      %s135 = smul.u32 3, %s13
      %p136 = scmp.lt.s32.totalorder %s135, 5
      %s137 = scalar_select %p136, %s135, 5
      %s138 = smul.addr %s137, 4
      %s139 = scalar_lea.vmem %s0, %s138
      %s140 = smul.u32 3, %s13
      %s141 = smul.u32 3, %s13
      %p142 = scmp.lt.s32.totalorder %s141, 5
      %s143 = scalar_select %p142, %s141, 5
      %s144 = smul.addr %s143, 8
      %s145 = scalar_lea.vmem %s2, %s144
      %s146 = smul.u32 3, %s13
      %v147 = vld [vmem:[%s139] sm:$0xff]
      %v148 = vld [vmem:[%s139 + $0x8] sm:$0xf]
      %v150 = vcombine.high %v147, %v147
      %152 = vst [vmem:[#allocation2] sm:$0xf] %v147
      %153 = vst [vmem:[#allocation2 + $0x8] sm:$0xf] %v150
      %154 = vst [vmem:[#allocation2 + $0x10] sm:$0xf] %v148
      %155 = vrot.lane.b32.xlu0 %v147, 127
      %v156 = vpop.permute.xlu0 %155
      %157 = vrot.lane.b32.xlu0 %v150, 127
      %v158 = vpop.permute.xlu0 %157
      %159 = vrot.lane.b32.xlu0 %v148, 127
      %v160 = vpop.permute.xlu0 %159
      %v161 = vlaneseq
      %v162 = vand.u32 %v161, 127
      %vm163 = vcmp.lt.s32.totalorder %v162, 127
      %v164 = vsel %vm163, %v158, %v160
      %v165 = vsel %vm163, %v156, %v158
      %v166 = vsel %vm163, %v160, %v156
      %v170 = vrot.slane %v165, 4
      %v171 = vrot.slane %v164, 4
      %v172 = vrot.slane %v166, 4
      %176 = vst [vmem:[#allocation2] sm:$0xf0] %v170
      %177 = vst [vmem:[#allocation2 + $0x8] sm:$0xf0] %v171
      %178 = vst [vmem:[#allocation2 + $0x10] sm:$0xf0] %v172
      %179 = vrot.lane.b32.xlu0 %v147, 126
      %v180 = vpop.permute.xlu0 %179
      %181 = vrot.lane.b32.xlu0 %v150, 126
      %v182 = vpop.permute.xlu0 %181
      %183 = vrot.lane.b32.xlu0 %v148, 126
      %v184 = vpop.permute.xlu0 %183
      %vm185 = vcmp.lt.s32.totalorder %v162, 126
      %v186 = vsel %vm185, %v182, %v184
      %v187 = vsel %vm185, %v180, %v182
      %v188 = vsel %vm185, %v184, %v180
      %189 = vst [vmem:[#allocation2 + $0x18] sm:$0xf] %v187
      %190 = vst [vmem:[#allocation2 + $0x20] sm:$0xf] %v186
      %191 = vst [vmem:[#allocation2 + $0x28] sm:$0xf] %v188
      %192 = vrot.lane.b32.xlu0 %v147, 110
      %v193 = vpop.permute.xlu0 %192
      %194 = vrot.lane.b32.xlu0 %v150, 110
      %v195 = vpop.permute.xlu0 %194
      %196 = vrot.lane.b32.xlu0 %v148, 110
      %v197 = vpop.permute.xlu0 %196
      %vm198 = vcmp.lt.s32.totalorder %v162, 110
      %v199 = vsel %vm198, %v195, %v197
      %v200 = vsel %vm198, %v193, %v195
      %v201 = vsel %vm198, %v197, %v193
      %v205 = vrot.slane %v200, 4
      %v206 = vrot.slane %v199, 4
      %v207 = vrot.slane %v201, 4
      %211 = vst [vmem:[#allocation2 + $0x18] sm:$0xf0] %v205
      %212 = vst [vmem:[#allocation2 + $0x20] sm:$0xf0] %v206
      %213 = vst [vmem:[#allocation2 + $0x28] sm:$0xf0] %v207
      %214 = vrot.lane.b32.xlu0 %v147, 109
      %v215 = vpop.permute.xlu0 %214
      %216 = vrot.lane.b32.xlu0 %v150, 109
      %v217 = vpop.permute.xlu0 %216
      %218 = vrot.lane.b32.xlu0 %v148, 109
      %v219 = vpop.permute.xlu0 %218
      %vm220 = vcmp.lt.s32.totalorder %v162, 109
      %v221 = vsel %vm220, %v217, %v219
      %v222 = vsel %vm220, %v215, %v217
      %v223 = vsel %vm220, %v219, %v215
      %224 = vst [vmem:[#allocation2 + $0x30] sm:$0xf] %v222
      %225 = vst [vmem:[#allocation2 + $0x38] sm:$0xf] %v221
      %226 = vst [vmem:[#allocation2 + $0x40] sm:$0xf] %v223
      %227 = vrot.lane.b32.xlu0 %v147, 108
      %v228 = vpop.permute.xlu0 %227
      %229 = vrot.lane.b32.xlu0 %v150, 108
      %v230 = vpop.permute.xlu0 %229
      %231 = vrot.lane.b32.xlu0 %v148, 108
      %v232 = vpop.permute.xlu0 %231
      %vm233 = vcmp.lt.s32.totalorder %v162, 108
      %v234 = vsel %vm233, %v230, %v232
      %v235 = vsel %vm233, %v228, %v230
      %v236 = vsel %vm233, %v232, %v228
      %v240 = vrot.slane %v235, 4
      %v241 = vrot.slane %v234, 4
      %v242 = vrot.slane %v236, 4
      %246 = vst [vmem:[#allocation2 + $0x30] sm:$0xf0] %v240
      %247 = vst [vmem:[#allocation2 + $0x38] sm:$0xf0] %v241
      %248 = vst [vmem:[#allocation2 + $0x40] sm:$0xf0] %v242
      %249 = vrot.lane.b32.xlu0 %v147, 92
      %v250 = vpop.permute.xlu0 %249
      %251 = vrot.lane.b32.xlu0 %v150, 92
      %v252 = vpop.permute.xlu0 %251
      %253 = vrot.lane.b32.xlu0 %v148, 92
      %v254 = vpop.permute.xlu0 %253
      %vm255 = vcmp.lt.s32.totalorder %v162, 92
      %v256 = vsel %vm255, %v252, %v254
      %v257 = vsel %vm255, %v250, %v252
      %v258 = vsel %vm255, %v254, %v250
      %259 = vst [vmem:[#allocation2 + $0x48] sm:$0xf] %v257
      %260 = vst [vmem:[#allocation2 + $0x50] sm:$0xf] %v256
      %261 = vst [vmem:[#allocation2 + $0x58] sm:$0xf] %v258
      %262 = vrot.lane.b32.xlu0 %v147, 91
      %v263 = vpop.permute.xlu0 %262
      %264 = vrot.lane.b32.xlu0 %v150, 91
      %v265 = vpop.permute.xlu0 %264
      %266 = vrot.lane.b32.xlu0 %v148, 91
      %v267 = vpop.permute.xlu0 %266
      %vm268 = vcmp.lt.s32.totalorder %v162, 91
      %v269 = vsel %vm268, %v265, %v267
      %v270 = vsel %vm268, %v263, %v265
      %v271 = vsel %vm268, %v267, %v263
      %v275 = vrot.slane %v270, 4
      %v276 = vrot.slane %v269, 4
      %v277 = vrot.slane %v271, 4
      %281 = vst [vmem:[#allocation2 + $0x48] sm:$0xf0] %v275
      %282 = vst [vmem:[#allocation2 + $0x50] sm:$0xf0] %v276
      %283 = vst [vmem:[#allocation2 + $0x58] sm:$0xf0] %v277
      %284 = vrot.lane.b32.xlu0 %v147, 90
      %v285 = vpop.permute.xlu0 %284
      %286 = vrot.lane.b32.xlu0 %v150, 90
      %v287 = vpop.permute.xlu0 %286
      %288 = vrot.lane.b32.xlu0 %v148, 90
      %v289 = vpop.permute.xlu0 %288
      %vm290 = vcmp.lt.s32.totalorder %v162, 90
      %v291 = vsel %vm290, %v287, %v289
      %v292 = vsel %vm290, %v285, %v287
      %v293 = vsel %vm290, %v289, %v285
      %294 = vst [vmem:[#allocation2 + $0x60] sm:$0xf] %v292
      %295 = vst [vmem:[#allocation2 + $0x68] sm:$0xf] %v291
      %296 = vst [vmem:[#allocation2 + $0x70] sm:$0xf] %v293
      %v297 = vld [vmem:[%s1] sm:$0xff]
      %v298 = vld [vmem:[#allocation2] sm:$0xff]
      %v299 = vld [vmem:[#allocation2 + $0x8] sm:$0xff]
      %v300 = vld [vmem:[#allocation2 + $0x10] sm:$0xff]
      %v301 = vld [vmem:[#allocation2 + $0x18] sm:$0xff]
      %v302 = vld [vmem:[#allocation2 + $0x20] sm:$0xff]
      %v303 = vld [vmem:[#allocation2 + $0x28] sm:$0xff]
      %v304 = vld [vmem:[#allocation2 + $0x30] sm:$0xff]
      %v305 = vld [vmem:[#allocation2 + $0x38] sm:$0xff]
      %v306 = vld [vmem:[#allocation2 + $0x40] sm:$0xff]
      %v307 = vld [vmem:[#allocation2 + $0x48] sm:$0xff]
      %v308 = vld [vmem:[#allocation2 + $0x50] sm:$0xff]
      %v309 = vld [vmem:[#allocation2 + $0x58] sm:$0xff]
      %v310 = vld [vmem:[#allocation2 + $0x60] sm:$0xf]
      %v311 = vld [vmem:[#allocation2 + $0x68] sm:$0xf]
      %v312 = vld [vmem:[#allocation2 + $0x70] sm:$0xf]
      %vm313 = vcmask 293888
      %v315 = vsel %vm313, %v297, 0
      %vm317 = vcmask 1043456
      %v319 = vsel %vm317, %v310, 0
      %v322 = vsel %vm317, %v311, 0
      %v325 = vsel %vm317, %v312, 0
      %327 = vmatprep.subr.mxu0 %v299
      %328 = vmatpush1.msra.mxu0 %v298
      %329 = vmatprep.subr.mxu0 %v302
      %330 = vmatpush1.msra.mxu0 %v301
      %331 = vmatprep.subr.mxu0 %v305
      %332 = vmatpush1.msra.mxu0 %v304
      %333 = vmatprep.subr.mxu0 %v308
      %334 = vmatpush1.msra.mxu0 %v307
      %335 = vmatprep.subr.mxu0 %v322
      %336 = vmatpush1.msra.mxu0 %v319
      %337 = vmatprep.subr.mxu0 0.0
      %338 = vmatpush1.msra.mxu0 0.0
      %339 = vmatprep.subr.mxu0 0.0
      %340 = vmatpush1.msra.mxu0 0.0
      %341 = vmatprep.subr.mxu0 0.0
      %342 = vmatpush1.msra.mxu0 0.0
      %343 = vmatprep.subr.mxu0 0.0
      %344 = vmatpush1.msra.mxu0 0.0
      %345 = vmatprep.subr.mxu0 0.0
      %346 = vmatpush1.msra.mxu0 0.0
      %347 = vmatprep.subr.mxu0 0.0
      %348 = vmatpush1.msra.mxu0 0.0
      %349 = vmatprep.subr.mxu0 0.0
      %350 = vmatpush1.msra.mxu0 0.0
      %351 = vmatprep.subr.mxu0 0.0
      %352 = vmatpush1.msra.mxu0 0.0
      %353 = vmatprep.subr.mxu0 0.0
      %354 = vmatpush1.msra.mxu0 0.0
      %355 = vmatprep.subr.mxu0 0.0
      %356 = vmatpush1.msra.mxu0 0.0
      %357 = vmatprep.subr.mxu0 0.0
      %358 = vmatpush1.msra.mxu0 0.0
      %359 = vmatprep.subr.mxu0 0.0
      %360 = vmatpush1.msra.mxu0 0.0
      %361 = vmatprep.subr.mxu0 0.0
      %362 = vmatpush1.msra.mxu0 0.0
      %363 = vmatprep.subr.mxu0 0.0
      %364 = vmatpush1.msra.mxu0 0.0
      %365 = vmatprep.subr.mxu0 0.0
      %366 = vmatpush1.msra.mxu0 0.0
      %367 = vmatprep.subr.mxu0 0.0
      %368 = vmatpush1.msra.mxu0 0.0
      %369 = vmatprep.subr.mxu0 0.0
      %370 = vmatpush1.msra.mxu0 0.0
      %371 = vmatprep.subr.mxu0 0.0
      %372 = vmatpush1.msra.mxu0 0.0
      %373 = vmatprep.subr.mxu0 0.0
      %374 = vmatpush1.msra.mxu0 0.0
      %375 = vmatprep.subr.mxu0 0.0
      %376 = vmatpush1.msra.mxu0 0.0
      %377 = vmatprep.subr.mxu0 0.0
      %378 = vmatpush1.msra.mxu0 0.0
      %379 = vmatprep.subr.mxu0 0.0
      %380 = vmatpush1.msra.mxu0 0.0
      %381 = vmatprep.subr.mxu0 0.0
      %382 = vmatpush1.msra.mxu0 0.0
      %383 = vmatprep.subr.mxu0 0.0
      %384 = vmatpush1.msra.mxu0 0.0
      %385 = vmatprep.subr.mxu0 0.0
      %386 = vmatpush1.msra.mxu0 0.0
      %387 = vmatprep.subr.mxu0 0.0
      %388 = vmatpush1.msra.mxu0 0.0
      %389 = vmatprep.subr.mxu0 0.0
      %390 = vmatpush1.msra.mxu0 0.0
      %391 = vmatprep.mubr.f32.mxu0 0.0
      %392 = vmatmul.mubr.f32.gmra.mrb[0].mxu0 %v315
      %v393 = vpop.f32.mrb[0].mxu0
      %v394 = vadd.f32 0.0, %v393
      %v395 = vpop.f32.mrb[0].mxu0
      %v396 = vadd.f32 0.0, %v395
      %397 = vdwg.mxu0
      %398 = vmatprep.subr.mxu0 0.0
      %399 = vmatpush1.msra.mxu0 %v300
      %400 = vmatprep.subr.mxu0 0.0
      %401 = vmatpush1.msra.mxu0 %v303
      %402 = vmatprep.subr.mxu0 0.0
      %403 = vmatpush1.msra.mxu0 %v306
      %404 = vmatprep.subr.mxu0 0.0
      %405 = vmatpush1.msra.mxu0 %v309
      %406 = vmatprep.subr.mxu0 0.0
      %407 = vmatpush1.msra.mxu0 %v325
      %408 = vmatprep.subr.mxu0 0.0
      %409 = vmatpush1.msra.mxu0 0.0
      %410 = vmatprep.subr.mxu0 0.0
      %411 = vmatpush1.msra.mxu0 0.0
      %412 = vmatprep.subr.mxu0 0.0
      %413 = vmatpush1.msra.mxu0 0.0
      %414 = vmatprep.subr.mxu0 0.0
      %415 = vmatpush1.msra.mxu0 0.0
      %416 = vmatprep.subr.mxu0 0.0
      %417 = vmatpush1.msra.mxu0 0.0
      %418 = vmatprep.subr.mxu0 0.0
      %419 = vmatpush1.msra.mxu0 0.0
      %420 = vmatprep.subr.mxu0 0.0
      %421 = vmatpush1.msra.mxu0 0.0
      %422 = vmatprep.subr.mxu0 0.0
      %423 = vmatpush1.msra.mxu0 0.0
      %424 = vmatprep.subr.mxu0 0.0
      %425 = vmatpush1.msra.mxu0 0.0
      %426 = vmatprep.subr.mxu0 0.0
      %427 = vmatpush1.msra.mxu0 0.0
      %428 = vmatprep.subr.mxu0 0.0
      %429 = vmatpush1.msra.mxu0 0.0
      %430 = vmatprep.subr.mxu0 0.0
      %431 = vmatpush1.msra.mxu0 0.0
      %432 = vmatprep.subr.mxu0 0.0
      %433 = vmatpush1.msra.mxu0 0.0
      %434 = vmatprep.subr.mxu0 0.0
      %435 = vmatpush1.msra.mxu0 0.0
      %436 = vmatprep.subr.mxu0 0.0
      %437 = vmatpush1.msra.mxu0 0.0
      %438 = vmatprep.subr.mxu0 0.0
      %439 = vmatpush1.msra.mxu0 0.0
      %440 = vmatprep.subr.mxu0 0.0
      %441 = vmatpush1.msra.mxu0 0.0
      %442 = vmatprep.subr.mxu0 0.0
      %443 = vmatpush1.msra.mxu0 0.0
      %444 = vmatprep.subr.mxu0 0.0
      %445 = vmatpush1.msra.mxu0 0.0
      %446 = vmatprep.subr.mxu0 0.0
      %447 = vmatpush1.msra.mxu0 0.0
      %448 = vmatprep.subr.mxu0 0.0
      %449 = vmatpush1.msra.mxu0 0.0
      %450 = vmatprep.subr.mxu0 0.0
      %451 = vmatpush1.msra.mxu0 0.0
      %452 = vmatprep.subr.mxu0 0.0
      %453 = vmatpush1.msra.mxu0 0.0
      %454 = vmatprep.subr.mxu0 0.0
      %455 = vmatpush1.msra.mxu0 0.0
      %456 = vmatprep.subr.mxu0 0.0
      %457 = vmatpush1.msra.mxu0 0.0
      %458 = vmatprep.subr.mxu0 0.0
      %459 = vmatpush1.msra.mxu0 0.0
      %460 = vmatprep.subr.mxu0 0.0
      %461 = vmatpush1.msra.mxu0 0.0
      %462 = vmatprep.mubr.f32.mxu0 0.0
      %463 = vmatmul.mubr.f32.gmra.mrb[0].mxu0 %v315
      %v464 = vpop.f32.mrb[0].mxu0
      %v465 = vadd.f32 0.0, %v464
      %v466 = vpop.f32.mrb[0].mxu0
      %467 = vdwg.mxu0
      %468 = vst [vmem:[%s145] sm:$0xff] %v394
      %469 = vst [vmem:[%s145 + $0x8] sm:$0xff] %v396
      %470 = vst [vmem:[%s145 + $0x10] sm:$0xff] %v465
      %s471 = smul.u32 3, %s13
      %p472 = scmp.lt.s32.totalorder %s471, 5
      %s473 = scalar_select %p472, %s471, 5
      %s474 = smul.addr %s473, 8
      %s475 = scalar_lea.vmem %s2, %s474
      // Predicated region
      $region29: #{factorized_conv_forward.1} parent=27 // pred_check
        %p476 = pneg %p78
      $region30: #{factorized_conv_forward.1} parent=27 // pred_check_branch
        %478 = sbr.rel (%p476) target = $region32
      $region31: #{factorized_conv_forward.1} parent=27 // pred_region
        %s479 = smul.u32 3, %s13
      $region32: #{factorized_conv_forward.1} parent=27 // pred_fallthru
        _
    $region28: #{factorized_conv_forward.1} parent=5 // pred_fallthru
      _
    %p480 = scmp.le.s32.totalorder 2, %s8
    // Predicated region
    $region33: #{factorized_conv_forward.1} parent=5 // pred_check
      %p481 = pneg %p480
    $region34: #{factorized_conv_forward.1} parent=5 // pred_check_branch
      %483 = sbr.rel (%p481) target = $region36
    $region35: #{factorized_conv_forward.1} parent=5 // pred_region
      %s484 = ssub.s32 %s8, 2
      // Predicated region
      $region37: #{factorized_conv_forward.1} parent=35 // pred_check
        %p485 = pneg %p84
      $region38: #{factorized_conv_forward.1} parent=35 // pred_check_branch
        %487 = sbr.rel (%p485) target = $region40
      $region39: #{factorized_conv_forward.1} parent=35 // pred_region
        %s488 = smul.u32 3, %s14
        %p489 = scmp.lt.s32.totalorder %s488, 5
        %s490 = scalar_select %p489, %s488, 5
        %s491 = smul.addr %s490, 8
        %s492 = scalar_lea.vmem %s2, %s491
      $region40: #{factorized_conv_forward.1} parent=35 // pred_fallthru
        _
    $region36: #{factorized_conv_forward.1} parent=5 // pred_fallthru
      _
  $region6: #{factorized_conv_forward.1} parent=0 // loop_footer
    %s12 = sadd.s32 1, %s8
  $region7: #{factorized_conv_forward.1} parent=0 // loop_footer_branch
    %7 = sbr.rel target = $region3
  $region8: #{factorized_conv_forward.1} parent=0 // loop_exit
    _

</llo_original>
